<compile_context>
chip_gen: v5e
topology: v5e:2x2
jax: 0.10.0
libtpu: 0.0.40
codegen_flags: <defaults>
</compile_context>

<pallas_src>
import jax
import jax.numpy as jnp
from jax import lax
from jax.experimental import pallas as pl
from jax.experimental.pallas import tpu as pltpu


def _withbias_layernorm_kernel(x_ref, w_ref, b_ref, o_ref):
    # x_ref: (TILE_ROWS, C); w_ref/b_ref: (1, C) (broadcast over rows).
    x = x_ref[...].astype(jnp.float32)
    inv_c = jnp.float32(1.0 / x.shape[-1])
    # Two independent cross-lane reductions so the XLU trees can pipeline.
    mu = jnp.sum(x, axis=-1, keepdims=True) * inv_c
    ex2 = jnp.sum(x * x, axis=-1, keepdims=True) * inv_c
    # Population variance (PyTorch unbiased=False); clamp against fp roundoff.
    var = jnp.maximum(ex2 - mu * mu, 0.0)
    inv = lax.rsqrt(var + 1e-5)                      # EUP
    w = w_ref[...].astype(jnp.float32)
    b = b_ref[...].astype(jnp.float32)
    o_ref[...] = ((x - mu) * inv * w + b).astype(o_ref.dtype)


def _round_up(v, m):
    return ((v + m - 1) // m) * m


def _pick_tile_rows(rows, c, itemsize):
    """Largest row tile that fits a conservative VMEM budget on v5e/v6e/v7x."""
    try:
        vmem_cap = int(getattr(pltpu.get_tpu_info(), "vmem_capacity_bytes",
                               64 << 20))
    except Exception:  # interpret mode / older runtimes
        vmem_cap = 64 << 20  # v7x per-TC capacity: safe lower bound
    # Input block + output block, each double-buffered => ~4 resident block
    # copies (+ headroom); stay well under physical capacity on every chip.
    block_bytes = min(vmem_cap // 12, 8 << 20)
    tile = max(block_bytes // max(c * itemsize, 1), 16)
    tile = max((tile // 16) * 16, 16)  # multiple of 16: fine for f32 and bf16
    # Keep >= ~8 grid steps when rows allow it, so v7x's two TensorCores both
    # get work and the DMA pipeline has depth (but never shrink below 512).
    per_step = _round_up(pl.cdiv(rows, 8), 16)
    if per_step >= 512:
        tile = min(tile, per_step)
    # Don't make the tile (much) bigger than the whole problem.
    tile = min(tile, _round_up(rows, 16))
    return tile


def withbias_layernorm(x, weight, bias, *, tile_rows=None):
    """(x - mean) / sqrt(var_pop + 1e-5) * weight + bias over the last axis.

    x: (..., C); weight, bias: (C,). Returns same shape/dtype as x.
    """
    orig_shape = x.shape
    C = orig_shape[-1]
    rows = 1
    for d in orig_shape[:-1]:
        rows *= d
    x2 = x.reshape(rows, C)         # contiguous-merge reshape: no HBM copy
    w2 = weight.reshape(1, C)
    b2 = bias.reshape(1, C)

    itemsize = jnp.dtype(x.dtype).itemsize
    if tile_rows is None:
        tile_rows = _pick_tile_rows(rows, C, itemsize)

    # cdiv grid, no padding copy: Pallas clips reads/writes of the partial
    # last block; its garbage rows are per-row independent and never stored.
    grid = (pl.cdiv(rows, tile_rows),)

    tile_bytes = tile_rows * C * itemsize
    vmem_limit = int(min(max(4 * tile_bytes + (4 << 20), 16 << 20), 56 << 20))

    # TODO(synk): for C < 128 (e.g. Restormer C=48) the last dim is not
    # lane-dense; a packed (rows/g, g*C) layout with an in-lane segmented
    # reduction would recover the masked sub-128 store bandwidth, but the
    # required relayout/segment-sum is not worth the risk for a mem-bound op.
    out = pl.pallas_call(
        _withbias_layernorm_kernel,
        out_shape=jax.ShapeDtypeStruct((rows, C), x.dtype),
        grid_spec=pltpu.PrefetchScalarGridSpec(
            num_scalar_prefetch=0,
            grid=grid,
            in_specs=[
                pl.BlockSpec((tile_rows, C), lambda i: (i, 0)),
                pl.BlockSpec((1, C), lambda i: (0, 0)),
                pl.BlockSpec((1, C), lambda i: (0, 0)),
            ],
            out_specs=pl.BlockSpec((tile_rows, C), lambda i: (i, 0)),
        ),
        compiler_params=pltpu.CompilerParams(
            dimension_semantics=("parallel",),
            vmem_limit_bytes=vmem_limit,
        ),
    )(x2, w2, b2)
    return out.reshape(orig_shape)


def _reference(x, weight, bias):
    # Pure-JAX reference matching the PyTorch forward exactly.
    x32 = x.astype(jnp.float32)
    mu = jnp.mean(x32, axis=-1, keepdims=True)
    sigma = jnp.mean((x32 - mu) ** 2, axis=-1, keepdims=True)  # unbiased=False
    y = (x32 - mu) / jnp.sqrt(sigma + 1e-5) * weight.astype(jnp.float32) \
        + bias.astype(jnp.float32)
    return y.astype(x.dtype)


if __name__ == "__main__":
    key = jax.random.PRNGKey(0)
    k1, k2, k3, k4 = jax.random.split(key, 4)

    # Restormer-style tokens: batch=2, 8x8 spatial -> 64 tokens, C=48 channels.
    B, HW, C = 2, 64, 48
    x = jax.random.normal(k1, (B, HW, C), dtype=jnp.float32)
    weight = jnp.ones((C,), dtype=jnp.float32)   # module __init__ values
    bias = jnp.zeros((C,), dtype=jnp.float32)

    y = jax.block_until_ready(withbias_layernorm(x, weight, bias))
    y_ref = _reference(x, weight, bias)
    assert y.shape == x.shape and y.dtype == x.dtype
    assert jnp.allclose(y, y_ref, atol=1e-5, rtol=1e-5), (
        float(jnp.max(jnp.abs(y - y_ref)))
    )

    # Second case: random affine params + row count that does not divide the
    # tile (exercises the clipped partial-block path, no padding copy).
    B2, T2, C2 = 3, 50, 32
    x2 = jax.random.normal(k2, (B2, T2, C2), dtype=jnp.float32) * 3.0 + 0.5
    w2 = jax.random.normal(k3, (C2,), dtype=jnp.float32)
    b2 = jax.random.normal(k4, (C2,), dtype=jnp.float32)
    y2 = jax.block_until_ready(withbias_layernorm(x2, w2, b2))
    y2_ref = _reference(x2, w2, b2)
    assert jnp.allclose(y2, y2_ref, atol=1e-4, rtol=1e-4), (
        float(jnp.max(jnp.abs(y2 - y2_ref)))
    )

    # Third case: bf16 activations with a lane-dense C (multiple of 128).
    B3, T3, C3 = 2, 200, 256
    x3 = jax.random.normal(k2, (B3, T3, C3), dtype=jnp.bfloat16)
    w3 = (jax.random.normal(k3, (C3,), dtype=jnp.float32) * 0.1 + 1.0)
    b3 = jax.random.normal(k4, (C3,), dtype=jnp.float32) * 0.1
    y3 = jax.block_until_ready(withbias_layernorm(x3, w3, b3))
    y3_ref = _reference(x3, w3, b3)
    assert y3.dtype == jnp.bfloat16
    assert jnp.allclose(y3.astype(jnp.float32), y3_ref.astype(jnp.float32),
                        atol=3e-2, rtol=3e-2), (
        float(jnp.max(jnp.abs(y3.astype(jnp.float32)
                              - y3_ref.astype(jnp.float32))))
    )

    print("KERNEL_OK")
</pallas_src>

<mosaic_0001>
module attributes {stable_mosaic.version = 11 : i64} {
  func.func @_withbias_layernorm_kernel(%arg0: i32, %arg1: memref<128x48xf32, #tpu.memory_space<vmem>>, %arg2: memref<1x48xf32, #tpu.memory_space<vmem>>, %arg3: memref<1x48xf32, #tpu.memory_space<vmem>>, %arg4: memref<128x48xf32, #tpu.memory_space<vmem>>) attributes {dimension_semantics = [#tpu.dimension_semantics<parallel>], iteration_bounds = array<i64: 1>, scalar_prefetch = 0 : i64, scratch_operands = 0 : i64, tpu.core_type = #tpu.core_type<tc>, window_params = [{transform_indices = @transform_0, window_bounds = array<i64: 128, 48>}, {pipeline_mode = #tpu.pipeline_mode<synchronous>, transform_indices = @transform_1, window_bounds = array<i64: 1, 48>}, {pipeline_mode = #tpu.pipeline_mode<synchronous>, transform_indices = @transform_2, window_bounds = array<i64: 1, 48>}, {transform_indices = @transform_3, window_bounds = array<i64: 128, 48>}]} {
    %c0 = arith.constant 0 : index
    %c0_0 = arith.constant 0 : index
    %0 = vector.load %arg1[%c0, %c0_0] : memref<128x48xf32, #tpu.memory_space<vmem>>, vector<128x48xf32>
    %cst = arith.constant dense<0.000000e+00> : vector<128xf32>
    %1 = vector.multi_reduction <add>, %0, %cst [1] : vector<128x48xf32> to vector<128xf32>
    %2 = vector.shape_cast %1 : vector<128xf32> to vector<128x1xf32>
    %cst_1 = arith.constant 0.020833334 : f32
    %3 = vector.broadcast %cst_1 : f32 to vector<128x1xf32>
    %4 = arith.mulf %2, %3 : vector<128x1xf32>
    %5 = arith.mulf %0, %0 : vector<128x48xf32>
    %cst_2 = arith.constant dense<0.000000e+00> : vector<128xf32>
    %6 = vector.multi_reduction <add>, %5, %cst_2 [1] : vector<128x48xf32> to vector<128xf32>
    %7 = vector.shape_cast %6 : vector<128xf32> to vector<128x1xf32>
    %cst_3 = arith.constant 0.020833334 : f32
    %8 = vector.broadcast %cst_3 : f32 to vector<128x1xf32>
    %9 = arith.mulf %7, %8 : vector<128x1xf32>
    %10 = arith.mulf %4, %4 : vector<128x1xf32>
    %11 = arith.subf %9, %10 : vector<128x1xf32>
    %cst_4 = arith.constant 0.000000e+00 : f32
    %12 = vector.broadcast %cst_4 : f32 to vector<128x1xf32>
    %13 = arith.maximumf %11, %12 : vector<128x1xf32>
    %cst_5 = arith.constant 9.99999974E-6 : f32
    %14 = vector.broadcast %cst_5 : f32 to vector<128x1xf32>
    %15 = arith.addf %13, %14 : vector<128x1xf32>
    %16 = math.rsqrt %15 : vector<128x1xf32>
    %c0_6 = arith.constant 0 : index
    %c0_7 = arith.constant 0 : index
    %17 = vector.load %arg2[%c0_6, %c0_7] : memref<1x48xf32, #tpu.memory_space<vmem>>, vector<1x48xf32>
    %c0_8 = arith.constant 0 : index
    %c0_9 = arith.constant 0 : index
    %18 = vector.load %arg3[%c0_8, %c0_9] : memref<1x48xf32, #tpu.memory_space<vmem>>, vector<1x48xf32>
    %19 = vector.broadcast %4 : vector<128x1xf32> to vector<128x48xf32>
    %20 = arith.subf %0, %19 : vector<128x48xf32>
    %21 = vector.broadcast %16 : vector<128x1xf32> to vector<128x48xf32>
    %22 = arith.mulf %20, %21 : vector<128x48xf32>
    %23 = vector.broadcast %17 : vector<1x48xf32> to vector<128x48xf32>
    %24 = arith.mulf %22, %23 : vector<128x48xf32>
    %25 = vector.broadcast %18 : vector<1x48xf32> to vector<128x48xf32>
    %26 = arith.addf %24, %25 : vector<128x48xf32>
    %c0_10 = arith.constant 0 : index
    %c0_11 = arith.constant 0 : index
    %27 = vector.load %arg4[%c0_10, %c0_11] : memref<128x48xf32, #tpu.memory_space<vmem>>, vector<128x48xf32>
    tpu.vector_store %arg4[%c0_10, %c0_11], %26 {strides = array<i32>} : memref<128x48xf32, #tpu.memory_space<vmem>>, vector<128x48xf32>,
    return
  }
  func.func @transform_0(%arg0: i32) -> (i32, i32) {
    %c0_i32 = arith.constant 0 : i32
    %c0_i32_0 = arith.constant 0 : i32
    return %arg0, %c0_i32 : i32, i32
  }
  func.func @transform_1(%arg0: i32) -> (i32, i32) {
    %c0_i32 = arith.constant 0 : i32
    %c0_i32_0 = arith.constant 0 : i32
    %c0_i32_1 = arith.constant 0 : i32
    return %c0_i32, %c0_i32_0 : i32, i32
  }
  func.func @transform_2(%arg0: i32) -> (i32, i32) {
    %c0_i32 = arith.constant 0 : i32
    %c0_i32_0 = arith.constant 0 : i32
    %c0_i32_1 = arith.constant 0 : i32
    return %c0_i32, %c0_i32_0 : i32, i32
  }
  func.func @transform_3(%arg0: i32) -> (i32, i32) {
    %c0_i32 = arith.constant 0 : i32
    %c0_i32_0 = arith.constant 0 : i32
    return %arg0, %c0_i32 : i32, i32
  }
}

</mosaic_0001>

<llo_original>
// kernel: tpu_custom_call.1
$region0: #{tpu_custom_call.1}
  #allocation0 [shape = 'u32[]', space=smem, size = 0x4, offset = 0x4, fixed_abs, tag = 'smem constant byte address 0x4 - core index']
  #allocation1 [shape = 'u32[72,128]{1,0:T(1,128)}', space=vmem, size = 0x9000, scoped, tag = 'internal scratch']
  %s0 = inlined_call_operand.vmem [shape: f32[128,48], index: 0, kind: input, shape index: {}]
  %s1 = inlined_call_operand.vmem [shape: f32[1,48], index: 1, kind: input, shape index: {}]
  %s2 = inlined_call_operand.vmem [shape: f32[1,48], index: 2, kind: input, shape index: {}]
  %s3 = inlined_call_operand.vmem [shape: f32[128,48], index: 3, kind: output, shape index: {}]
  %s4 = sld [smem:[#allocation0]]
  $region22: #{tpu_custom_call.1} parent=0
    _
  %s6 = ssub.s32 1, %s4
  %s7 = scalar_select 0, %s6, %s4
  // Predicated region
  $region2: #{tpu_custom_call.1} parent=0 // pred_check
    _
  $region3: #{tpu_custom_call.1} parent=0 // pred_check_branch
    %9 = sbr.rel (0) target = $region5
  $region4: #{tpu_custom_call.1} parent=0 // pred_region
    _
  $region5: #{tpu_custom_call.1} parent=0 // pred_fallthru
    _
  // Predicated region
  $region6: #{tpu_custom_call.1} parent=0 // pred_check
    _
  $region7: #{tpu_custom_call.1} parent=0 // pred_check_branch
    %11 = sbr.rel (0) target = $region9
  $region8: #{tpu_custom_call.1} parent=0 // pred_region
    _
  $region9: #{tpu_custom_call.1} parent=0 // pred_fallthru
    _
  // Predicated region
  $region10: #{tpu_custom_call.1} parent=0 // pred_check
    _
  $region11: #{tpu_custom_call.1} parent=0 // pred_check_branch
    %13 = sbr.rel (0) target = $region13
  $region12: #{tpu_custom_call.1} parent=0 // pred_region
    _
  $region13: #{tpu_custom_call.1} parent=0 // pred_fallthru
    _
  %v14 = vld [vmem:[%s0] sm:$0xff]
  %v15 = vld [vmem:[%s0 + $0x8] sm:$0xff]
  %v16 = vld [vmem:[%s0 + $0x10] sm:$0xff]
  %v17 = vld [vmem:[%s0 + $0x18] sm:$0xff]
  %v18 = vld [vmem:[%s0 + $0x20] sm:$0xff]
  %v19 = vld [vmem:[%s0 + $0x28] sm:$0xff]
  %v20 = vld [vmem:[%s0 + $0x30] sm:$0xff]
  %v21 = vld [vmem:[%s0 + $0x38] sm:$0xff]
  %v22 = vld [vmem:[%s0 + $0x40] sm:$0xff]
  %v23 = vld [vmem:[%s0 + $0x48] sm:$0xff]
  %v24 = vld [vmem:[%s0 + $0x50] sm:$0xff]
  %v25 = vld [vmem:[%s0 + $0x58] sm:$0xff]
  %v26 = vld [vmem:[%s0 + $0x60] sm:$0xff]
  %v27 = vld [vmem:[%s0 + $0x68] sm:$0xff]
  %v28 = vld [vmem:[%s0 + $0x70] sm:$0xff]
  %v29 = vld [vmem:[%s0 + $0x78] sm:$0xff]
  %vm30 = vcmask 392192
  %v31 = vsel %vm30, %v14, 0.0
  %32 = vadd.xlane.f32.xlu0 %v31
  %v33 = vpop.xlane.xlu0 %32
  %v34 = vsel %vm30, %v15, 0.0
  %35 = vadd.xlane.f32.xlu0 %v34
  %v36 = vpop.xlane.xlu0 %35
  %v37 = vsel %vm30, %v16, 0.0
  %38 = vadd.xlane.f32.xlu0 %v37
  %v39 = vpop.xlane.xlu0 %38
  %v40 = vsel %vm30, %v17, 0.0
  %41 = vadd.xlane.f32.xlu0 %v40
  %v42 = vpop.xlane.xlu0 %41
  %v43 = vsel %vm30, %v18, 0.0
  %44 = vadd.xlane.f32.xlu0 %v43
  %v45 = vpop.xlane.xlu0 %44
  %v46 = vsel %vm30, %v19, 0.0
  %47 = vadd.xlane.f32.xlu0 %v46
  %v48 = vpop.xlane.xlu0 %47
  %v49 = vsel %vm30, %v20, 0.0
  %50 = vadd.xlane.f32.xlu0 %v49
  %v51 = vpop.xlane.xlu0 %50
  %v52 = vsel %vm30, %v21, 0.0
  %53 = vadd.xlane.f32.xlu0 %v52
  %v54 = vpop.xlane.xlu0 %53
  %v55 = vsel %vm30, %v22, 0.0
  %56 = vadd.xlane.f32.xlu0 %v55
  %v57 = vpop.xlane.xlu0 %56
  %v58 = vsel %vm30, %v23, 0.0
  %59 = vadd.xlane.f32.xlu0 %v58
  %v60 = vpop.xlane.xlu0 %59
  %v61 = vsel %vm30, %v24, 0.0
  %62 = vadd.xlane.f32.xlu0 %v61
  %v63 = vpop.xlane.xlu0 %62
  %v64 = vsel %vm30, %v25, 0.0
  %65 = vadd.xlane.f32.xlu0 %v64
  %v66 = vpop.xlane.xlu0 %65
  %v67 = vsel %vm30, %v26, 0.0
  %68 = vadd.xlane.f32.xlu0 %v67
  %v69 = vpop.xlane.xlu0 %68
  %v70 = vsel %vm30, %v27, 0.0
  %71 = vadd.xlane.f32.xlu0 %v70
  %v72 = vpop.xlane.xlu0 %71
  %v73 = vsel %vm30, %v28, 0.0
  %74 = vadd.xlane.f32.xlu0 %v73
  %v75 = vpop.xlane.xlu0 %74
  %v76 = vsel %vm30, %v29, 0.0
  %77 = vadd.xlane.f32.xlu0 %v76
  %v78 = vpop.xlane.xlu0 %77
  %v79 = vmul.f32 %v33, 0.020833334
  %v80 = vmul.f32 %v36, 0.020833334
  %v81 = vmul.f32 %v39, 0.020833334
  %v82 = vmul.f32 %v42, 0.020833334
  %v83 = vmul.f32 %v45, 0.020833334
  %v84 = vmul.f32 %v48, 0.020833334
  %v85 = vmul.f32 %v51, 0.020833334
  %v86 = vmul.f32 %v54, 0.020833334
  %v87 = vmul.f32 %v57, 0.020833334
  %v88 = vmul.f32 %v60, 0.020833334
  %v89 = vmul.f32 %v63, 0.020833334
  %v90 = vmul.f32 %v66, 0.020833334
  %v91 = vmul.f32 %v69, 0.020833334
  %v92 = vmul.f32 %v72, 0.020833334
  %v93 = vmul.f32 %v75, 0.020833334
  %v94 = vmul.f32 %v78, 0.020833334
  %v95 = vmul.f32 %v14, %v14
  %v96 = vmul.f32 %v15, %v15
  %v97 = vmul.f32 %v16, %v16
  %v98 = vmul.f32 %v17, %v17
  %v99 = vmul.f32 %v18, %v18
  %v100 = vmul.f32 %v19, %v19
  %v101 = vmul.f32 %v20, %v20
  %v102 = vmul.f32 %v21, %v21
  %v103 = vmul.f32 %v22, %v22
  %v104 = vmul.f32 %v23, %v23
  %v105 = vmul.f32 %v24, %v24
  %v106 = vmul.f32 %v25, %v25
  %v107 = vmul.f32 %v26, %v26
  %v108 = vmul.f32 %v27, %v27
  %v109 = vmul.f32 %v28, %v28
  %v110 = vmul.f32 %v29, %v29
  %v111 = vsel %vm30, %v95, 0.0
  %112 = vadd.xlane.f32.xlu0 %v111
  %v113 = vpop.xlane.xlu0 %112
  %v114 = vsel %vm30, %v96, 0.0
  %115 = vadd.xlane.f32.xlu0 %v114
  %v116 = vpop.xlane.xlu0 %115
  %v117 = vsel %vm30, %v97, 0.0
  %118 = vadd.xlane.f32.xlu0 %v117
  %v119 = vpop.xlane.xlu0 %118
  %v120 = vsel %vm30, %v98, 0.0
  %121 = vadd.xlane.f32.xlu0 %v120
  %v122 = vpop.xlane.xlu0 %121
  %v123 = vsel %vm30, %v99, 0.0
  %124 = vadd.xlane.f32.xlu0 %v123
  %v125 = vpop.xlane.xlu0 %124
  %v126 = vsel %vm30, %v100, 0.0
  %127 = vadd.xlane.f32.xlu0 %v126
  %v128 = vpop.xlane.xlu0 %127
  %v129 = vsel %vm30, %v101, 0.0
  %130 = vadd.xlane.f32.xlu0 %v129
  %v131 = vpop.xlane.xlu0 %130
  %v132 = vsel %vm30, %v102, 0.0
  %133 = vadd.xlane.f32.xlu0 %v132
  %v134 = vpop.xlane.xlu0 %133
  %v135 = vsel %vm30, %v103, 0.0
  %136 = vadd.xlane.f32.xlu0 %v135
  %v137 = vpop.xlane.xlu0 %136
  %v138 = vsel %vm30, %v104, 0.0
  %139 = vadd.xlane.f32.xlu0 %v138
  %v140 = vpop.xlane.xlu0 %139
  %v141 = vsel %vm30, %v105, 0.0
  %142 = vadd.xlane.f32.xlu0 %v141
  %v143 = vpop.xlane.xlu0 %142
  %v144 = vsel %vm30, %v106, 0.0
  %145 = vadd.xlane.f32.xlu0 %v144
  %v146 = vpop.xlane.xlu0 %145
  %v147 = vsel %vm30, %v107, 0.0
  %148 = vadd.xlane.f32.xlu0 %v147
  %v149 = vpop.xlane.xlu0 %148
  %v150 = vsel %vm30, %v108, 0.0
  %151 = vadd.xlane.f32.xlu0 %v150
  %v152 = vpop.xlane.xlu0 %151
  %v153 = vsel %vm30, %v109, 0.0
  %154 = vadd.xlane.f32.xlu0 %v153
  %v155 = vpop.xlane.xlu0 %154
  %v156 = vsel %vm30, %v110, 0.0
  %157 = vadd.xlane.f32.xlu0 %v156
  %v158 = vpop.xlane.xlu0 %157
  %v159 = vmul.f32 %v113, 0.020833334
  %v160 = vmul.f32 %v116, 0.020833334
  %v161 = vmul.f32 %v119, 0.020833334
  %v162 = vmul.f32 %v122, 0.020833334
  %v163 = vmul.f32 %v125, 0.020833334
  %v164 = vmul.f32 %v128, 0.020833334
  %v165 = vmul.f32 %v131, 0.020833334
  %v166 = vmul.f32 %v134, 0.020833334
  %v167 = vmul.f32 %v137, 0.020833334
  %v168 = vmul.f32 %v140, 0.020833334
  %v169 = vmul.f32 %v143, 0.020833334
  %v170 = vmul.f32 %v146, 0.020833334
  %v171 = vmul.f32 %v149, 0.020833334
  %v172 = vmul.f32 %v152, 0.020833334
  %v173 = vmul.f32 %v155, 0.020833334
  %v174 = vmul.f32 %v158, 0.020833334
  %v175 = vmul.f32 %v79, %v79
  %v176 = vmul.f32 %v80, %v80
  %v177 = vmul.f32 %v81, %v81
  %v178 = vmul.f32 %v82, %v82
  %v179 = vmul.f32 %v83, %v83
  %v180 = vmul.f32 %v84, %v84
  %v181 = vmul.f32 %v85, %v85
  %v182 = vmul.f32 %v86, %v86
  %v183 = vmul.f32 %v87, %v87
  %v184 = vmul.f32 %v88, %v88
  %v185 = vmul.f32 %v89, %v89
  %v186 = vmul.f32 %v90, %v90
  %v187 = vmul.f32 %v91, %v91
  %v188 = vmul.f32 %v92, %v92
  %v189 = vmul.f32 %v93, %v93
  %v190 = vmul.f32 %v94, %v94
  %v191 = vsub.f32 %v159, %v175
  %v192 = vsub.f32 %v160, %v176
  %v193 = vsub.f32 %v161, %v177
  %v194 = vsub.f32 %v162, %v178
  %v195 = vsub.f32 %v163, %v179
  %v196 = vsub.f32 %v164, %v180
  %v197 = vsub.f32 %v165, %v181
  %v198 = vsub.f32 %v166, %v182
  %v199 = vsub.f32 %v167, %v183
  %v200 = vsub.f32 %v168, %v184
  %v201 = vsub.f32 %v169, %v185
  %v202 = vsub.f32 %v170, %v186
  %v203 = vsub.f32 %v171, %v187
  %v204 = vsub.f32 %v172, %v188
  %v205 = vsub.f32 %v173, %v189
  %v206 = vsub.f32 %v174, %v190
  %v207 = vmax.f32 %v191, 0.0
  %v208 = vmax.f32 %v192, 0.0
  %v209 = vmax.f32 %v193, 0.0
  %v210 = vmax.f32 %v194, 0.0
  %v211 = vmax.f32 %v195, 0.0
  %v212 = vmax.f32 %v196, 0.0
  %v213 = vmax.f32 %v197, 0.0
  %v214 = vmax.f32 %v198, 0.0
  %v215 = vmax.f32 %v199, 0.0
  %v216 = vmax.f32 %v200, 0.0
  %v217 = vmax.f32 %v201, 0.0
  %v218 = vmax.f32 %v202, 0.0
  %v219 = vmax.f32 %v203, 0.0
  %v220 = vmax.f32 %v204, 0.0
  %v221 = vmax.f32 %v205, 0.0
  %v222 = vmax.f32 %v206, 0.0
  %v223 = vadd.f32 %v207, 1e-05
  %v224 = vadd.f32 %v208, 1e-05
  %v225 = vadd.f32 %v209, 1e-05
  %v226 = vadd.f32 %v210, 1e-05
  %v227 = vadd.f32 %v211, 1e-05
  %v228 = vadd.f32 %v212, 1e-05
  %v229 = vadd.f32 %v213, 1e-05
  %v230 = vadd.f32 %v214, 1e-05
  %v231 = vadd.f32 %v215, 1e-05
  %v232 = vadd.f32 %v216, 1e-05
  %v233 = vadd.f32 %v217, 1e-05
  %v234 = vadd.f32 %v218, 1e-05
  %v235 = vadd.f32 %v219, 1e-05
  %v236 = vadd.f32 %v220, 1e-05
  %v237 = vadd.f32 %v221, 1e-05
  %v238 = vadd.f32 %v222, 1e-05
  %v239 = vrsqrt.pop %v223
  %v240 = vmul.f32 %v239, %v223
  %v241 = vmul.f32 %v240, %v239
  %v242 = vmul.f32 0.5, %v241
  %v243 = vsub.f32 1.5, %v242
  %v244 = vmul.f32 %v239, %v243
  %vm245 = vweird.f32 %v223
  %vm246 = vweird.f32 %v239
  %vm247 = vmor %vm245, %vm246
  %v248 = vsel %vm247, %v239, %v244
  %v249 = vrsqrt.pop %v224
  %v250 = vmul.f32 %v249, %v224
  %v251 = vmul.f32 %v250, %v249
  %v252 = vmul.f32 0.5, %v251
  %v253 = vsub.f32 1.5, %v252
  %v254 = vmul.f32 %v249, %v253
  %vm255 = vweird.f32 %v224
  %vm256 = vweird.f32 %v249
  %vm257 = vmor %vm255, %vm256
  %v258 = vsel %vm257, %v249, %v254
  %v259 = vrsqrt.pop %v225
  %v260 = vmul.f32 %v259, %v225
  %v261 = vmul.f32 %v260, %v259
  %v262 = vmul.f32 0.5, %v261
  %v263 = vsub.f32 1.5, %v262
  %v264 = vmul.f32 %v259, %v263
  %vm265 = vweird.f32 %v225
  %vm266 = vweird.f32 %v259
  %vm267 = vmor %vm265, %vm266
  %v268 = vsel %vm267, %v259, %v264
  %v269 = vrsqrt.pop %v226
  %v270 = vmul.f32 %v269, %v226
  %v271 = vmul.f32 %v270, %v269
  %v272 = vmul.f32 0.5, %v271
  %v273 = vsub.f32 1.5, %v272
  %v274 = vmul.f32 %v269, %v273
  %vm275 = vweird.f32 %v226
  %vm276 = vweird.f32 %v269
  %vm277 = vmor %vm275, %vm276
  %v278 = vsel %vm277, %v269, %v274
  %v279 = vrsqrt.pop %v227
  %v280 = vmul.f32 %v279, %v227
  %v281 = vmul.f32 %v280, %v279
  %v282 = vmul.f32 0.5, %v281
  %v283 = vsub.f32 1.5, %v282
  %v284 = vmul.f32 %v279, %v283
  %vm285 = vweird.f32 %v227
  %vm286 = vweird.f32 %v279
  %vm287 = vmor %vm285, %vm286
  %v288 = vsel %vm287, %v279, %v284
  %v289 = vrsqrt.pop %v228
  %v290 = vmul.f32 %v289, %v228
  %v291 = vmul.f32 %v290, %v289
  %v292 = vmul.f32 0.5, %v291
  %v293 = vsub.f32 1.5, %v292
  %v294 = vmul.f32 %v289, %v293
  %vm295 = vweird.f32 %v228
  %vm296 = vweird.f32 %v289
  %vm297 = vmor %vm295, %vm296
  %v298 = vsel %vm297, %v289, %v294
  %v299 = vrsqrt.pop %v229
  %v300 = vmul.f32 %v299, %v229
  %v301 = vmul.f32 %v300, %v299
  %v302 = vmul.f32 0.5, %v301
  %v303 = vsub.f32 1.5, %v302
  %v304 = vmul.f32 %v299, %v303
  %vm305 = vweird.f32 %v229
  %vm306 = vweird.f32 %v299
  %vm307 = vmor %vm305, %vm306
  %v308 = vsel %vm307, %v299, %v304
  %v309 = vrsqrt.pop %v230
  %v310 = vmul.f32 %v309, %v230
  %v311 = vmul.f32 %v310, %v309
  %v312 = vmul.f32 0.5, %v311
  %v313 = vsub.f32 1.5, %v312
  %v314 = vmul.f32 %v309, %v313
  %vm315 = vweird.f32 %v230
  %vm316 = vweird.f32 %v309
  %vm317 = vmor %vm315, %vm316
  %v318 = vsel %vm317, %v309, %v314
  %v319 = vrsqrt.pop %v231
  %v320 = vmul.f32 %v319, %v231
  %v321 = vmul.f32 %v320, %v319
  %v322 = vmul.f32 0.5, %v321
  %v323 = vsub.f32 1.5, %v322
  %v324 = vmul.f32 %v319, %v323
  %vm325 = vweird.f32 %v231
  %vm326 = vweird.f32 %v319
  %vm327 = vmor %vm325, %vm326
  %v328 = vsel %vm327, %v319, %v324
  %v329 = vrsqrt.pop %v232
  %v330 = vmul.f32 %v329, %v232
  %v331 = vmul.f32 %v330, %v329
  %v332 = vmul.f32 0.5, %v331
  %v333 = vsub.f32 1.5, %v332
  %v334 = vmul.f32 %v329, %v333
  %vm335 = vweird.f32 %v232
  %vm336 = vweird.f32 %v329
  %vm337 = vmor %vm335, %vm336
  %v338 = vsel %vm337, %v329, %v334
  %v339 = vrsqrt.pop %v233
  %v340 = vmul.f32 %v339, %v233
  %v341 = vmul.f32 %v340, %v339
  %v342 = vmul.f32 0.5, %v341
  %v343 = vsub.f32 1.5, %v342
  %v344 = vmul.f32 %v339, %v343
  %vm345 = vweird.f32 %v233
  %vm346 = vweird.f32 %v339
  %vm347 = vmor %vm345, %vm346
  %v348 = vsel %vm347, %v339, %v344
  %v349 = vrsqrt.pop %v234
  %v350 = vmul.f32 %v349, %v234
  %v351 = vmul.f32 %v350, %v349
  %v352 = vmul.f32 0.5, %v351
  %v353 = vsub.f32 1.5, %v352
  %v354 = vmul.f32 %v349, %v353
  %vm355 = vweird.f32 %v234
  %vm356 = vweird.f32 %v349
  %vm357 = vmor %vm355, %vm356
  %v358 = vsel %vm357, %v349, %v354
  %v359 = vrsqrt.pop %v235
  %v360 = vmul.f32 %v359, %v235
  %v361 = vmul.f32 %v360, %v359
  %v362 = vmul.f32 0.5, %v361
  %v363 = vsub.f32 1.5, %v362
  %v364 = vmul.f32 %v359, %v363
  %vm365 = vweird.f32 %v235
  %vm366 = vweird.f32 %v359
  %vm367 = vmor %vm365, %vm366
  %v368 = vsel %vm367, %v359, %v364
  %v369 = vrsqrt.pop %v236
  %v370 = vmul.f32 %v369, %v236
  %v371 = vmul.f32 %v370, %v369
  %v372 = vmul.f32 0.5, %v371
  %v373 = vsub.f32 1.5, %v372
  %v374 = vmul.f32 %v369, %v373
  %vm375 = vweird.f32 %v236
  %vm376 = vweird.f32 %v369
  %vm377 = vmor %vm375, %vm376
  %v378 = vsel %vm377, %v369, %v374
  %v379 = vrsqrt.pop %v237
  %v380 = vmul.f32 %v379, %v237
  %v381 = vmul.f32 %v380, %v379
  %v382 = vmul.f32 0.5, %v381
  %v383 = vsub.f32 1.5, %v382
  %v384 = vmul.f32 %v379, %v383
  %vm385 = vweird.f32 %v237
  %vm386 = vweird.f32 %v379
  %vm387 = vmor %vm385, %vm386
  %v388 = vsel %vm387, %v379, %v384
  %v389 = vrsqrt.pop %v238
  %v390 = vmul.f32 %v389, %v238
  %v391 = vmul.f32 %v390, %v389
  %v392 = vmul.f32 0.5, %v391
  %v393 = vsub.f32 1.5, %v392
  %v394 = vmul.f32 %v389, %v393
  %vm395 = vweird.f32 %v238
  %vm396 = vweird.f32 %v389
  %vm397 = vmor %vm395, %vm396
  %v398 = vsel %vm397, %v389, %v394
  %v399 = vld [vmem:[%s1] sm:$0x1]
  %v400 = vld [vmem:[%s2] sm:$0x1]
  %v401 = vsub.f32 %v14, %v79
  %v402 = vsub.f32 %v15, %v80
  %v403 = vsub.f32 %v16, %v81
  %v404 = vsub.f32 %v17, %v82
  %v405 = vsub.f32 %v18, %v83
  %v406 = vsub.f32 %v19, %v84
  %v407 = vsub.f32 %v20, %v85
  %v408 = vsub.f32 %v21, %v86
  %v409 = vsub.f32 %v22, %v87
  %v410 = vsub.f32 %v23, %v88
  %v411 = vsub.f32 %v24, %v89
  %v412 = vsub.f32 %v25, %v90
  %v413 = vsub.f32 %v26, %v91
  %v414 = vsub.f32 %v27, %v92
  %v415 = vsub.f32 %v28, %v93
  %v416 = vsub.f32 %v29, %v94
  %v417 = vmul.f32 %v401, %v248
  %v418 = vmul.f32 %v402, %v258
  %v419 = vmul.f32 %v403, %v268
  %v420 = vmul.f32 %v404, %v278
  %v421 = vmul.f32 %v405, %v288
  %v422 = vmul.f32 %v406, %v298
  %v423 = vmul.f32 %v407, %v308
  %v424 = vmul.f32 %v408, %v318
  %v425 = vmul.f32 %v409, %v328
  %v426 = vmul.f32 %v410, %v338
  %v427 = vmul.f32 %v411, %v348
  %v428 = vmul.f32 %v412, %v358
  %v429 = vmul.f32 %v413, %v368
  %v430 = vmul.f32 %v414, %v378
  %v431 = vmul.f32 %v415, %v388
  %v432 = vmul.f32 %v416, %v398
  %v434 = vperm.slane %v399, 0
  %v436 = vmul.f32 %v417, %v434
  %v437 = vmul.f32 %v418, %v434
  %v438 = vmul.f32 %v419, %v434
  %v439 = vmul.f32 %v420, %v434
  %v440 = vmul.f32 %v421, %v434
  %v441 = vmul.f32 %v422, %v434
  %v442 = vmul.f32 %v423, %v434
  %v443 = vmul.f32 %v424, %v434
  %v444 = vmul.f32 %v425, %v434
  %v445 = vmul.f32 %v426, %v434
  %v446 = vmul.f32 %v427, %v434
  %v447 = vmul.f32 %v428, %v434
  %v448 = vmul.f32 %v429, %v434
  %v449 = vmul.f32 %v430, %v434
  %v450 = vmul.f32 %v431, %v434
  %v451 = vmul.f32 %v432, %v434
  %v453 = vperm.slane %v400, 0
  %v455 = vadd.f32 %v436, %v453
  %v456 = vadd.f32 %v437, %v453
  %v457 = vadd.f32 %v438, %v453
  %v458 = vadd.f32 %v439, %v453
  %v459 = vadd.f32 %v440, %v453
  %v460 = vadd.f32 %v441, %v453
  %v461 = vadd.f32 %v442, %v453
  %v462 = vadd.f32 %v443, %v453
  %v463 = vadd.f32 %v444, %v453
  %v464 = vadd.f32 %v445, %v453
  %v465 = vadd.f32 %v446, %v453
  %v466 = vadd.f32 %v447, %v453
  %v467 = vadd.f32 %v448, %v453
  %v468 = vadd.f32 %v449, %v453
  %v469 = vadd.f32 %v450, %v453
  %v470 = vadd.f32 %v451, %v453
  %471 = vst.msk [vmem:[%s3] sm:$0xff] %vm30, %v455
  %472 = vst.msk [vmem:[%s3 + $0x8] sm:$0xff] %vm30, %v456
  %473 = vst.msk [vmem:[%s3 + $0x10] sm:$0xff] %vm30, %v457
  %474 = vst.msk [vmem:[%s3 + $0x18] sm:$0xff] %vm30, %v458
  %475 = vst.msk [vmem:[%s3 + $0x20] sm:$0xff] %vm30, %v459
  %476 = vst.msk [vmem:[%s3 + $0x28] sm:$0xff] %vm30, %v460
  %477 = vst.msk [vmem:[%s3 + $0x30] sm:$0xff] %vm30, %v461
  %478 = vst.msk [vmem:[%s3 + $0x38] sm:$0xff] %vm30, %v462
  %479 = vst.msk [vmem:[%s3 + $0x40] sm:$0xff] %vm30, %v463
  %480 = vst.msk [vmem:[%s3 + $0x48] sm:$0xff] %vm30, %v464
  %481 = vst.msk [vmem:[%s3 + $0x50] sm:$0xff] %vm30, %v465
  %482 = vst.msk [vmem:[%s3 + $0x58] sm:$0xff] %vm30, %v466
  %483 = vst.msk [vmem:[%s3 + $0x60] sm:$0xff] %vm30, %v467
  %484 = vst.msk [vmem:[%s3 + $0x68] sm:$0xff] %vm30, %v468
  %485 = vst.msk [vmem:[%s3 + $0x70] sm:$0xff] %vm30, %v469
  %486 = vst.msk [vmem:[%s3 + $0x78] sm:$0xff] %vm30, %v470
  // Predicated region
  $region14: #{tpu_custom_call.1} parent=0 // pred_check
    _
  $region15: #{tpu_custom_call.1} parent=0 // pred_check_branch
    %488 = sbr.rel (0) target = $region17
  $region16: #{tpu_custom_call.1} parent=0 // pred_region
    _
  $region17: #{tpu_custom_call.1} parent=0 // pred_fallthru
    _
  // Predicated region
  $region18: #{tpu_custom_call.1} parent=0 // pred_check
    _
  $region19: #{tpu_custom_call.1} parent=0 // pred_check_branch
    %490 = sbr.rel (0) target = $region21
  $region20: #{tpu_custom_call.1} parent=0 // pred_region
    _
  $region21: #{tpu_custom_call.1} parent=0 // pred_fallthru
    _

</llo_original>
